<compile_context>
chip_gen: v6e
topology: v6e:2x2x1
jax: 0.10.0
libtpu: 0.0.40
codegen_flags: <defaults>
</compile_context>

<pallas_src>
import functools

import jax
import jax.numpy as jnp
from jax.experimental import pallas as pl
from jax.experimental.pallas import tpu as pltpu


def _ce_kernel(tgt_ref, logits_ref, out_ref, m_ref, s_ref, t_ref, *,
               pad_id, vocab, tv):
    """One (batch b, token-tile i, vocab-chunk v) grid step.

    tgt_ref:    (tm, 1)   int32     shifted targets (pad_id in padded tail)
    logits_ref: (tm, tv)  f32/bf16  logits chunk for vocab lanes [v*tv, v*tv+tv)
    out_ref:    (1, 1)    f32       per-(batch, token-tile) NLL partial sum
    m_ref/s_ref/t_ref: (tm, 1) f32  online-LSE running max / sum-exp / tgt logit
    """
    v = pl.program_id(2)
    nv = pl.num_programs(2)

    @pl.when(v == 0)
    def _():
        m_ref[...] = jnp.full_like(m_ref, -jnp.inf)
        s_ref[...] = jnp.zeros_like(s_ref)
        t_ref[...] = jnp.zeros_like(t_ref)

    tgt = tgt_ref[...]                                    # (tm, 1) int32
    x = logits_ref[...]                                   # (tm, tv) native dtype

    # Column ids of this vocab chunk: one (1, tv) row, broadcast against (tm, 1).
    col = jax.lax.broadcasted_iota(jnp.int32, (1, tv), 1) + v * tv
    lane_ok = col < vocab                                 # masks padded vocab lanes

    # Mask in the native dtype (bf16 stays bf16 on the VPU for v6e/v7x).
    xm = jnp.where(lane_ok, x, jnp.array(-jnp.inf, dtype=x.dtype))

    m_old = m_ref[...]
    m_new = jnp.maximum(
        m_old, jnp.max(xm, axis=-1, keepdims=True).astype(jnp.float32))

    shifted = xm.astype(jnp.float32) - m_new              # (tm, tv) f32
    # TODO(synk): bf16 exp via EUP on v6e/v7x; f32 keeps v5e safe & accurate.
    e = jnp.exp(shifted)                                  # padded lanes -> 0
    s_ref[...] = (s_ref[...] * jnp.exp(m_old - m_new)
                  + jnp.sum(e, axis=-1, keepdims=True))
    m_ref[...] = m_new

    # Target-logit gather reuses `shifted` (no second read of the raw chunk);
    # the per-row max is added back only for the chunk containing the target.
    onehot = col == tgt                                   # (tm, tv) bool
    t_part = jnp.sum(jnp.where(onehot, shifted, 0.0), axis=-1, keepdims=True)
    in_chunk = jnp.logical_and(tgt >= v * tv, tgt < (v + 1) * tv)
    t_ref[...] += t_part + jnp.where(in_chunk, m_new, 0.0)

    @pl.when(v == nv - 1)
    def _():
        lse = jnp.log(s_ref[...]) + m_ref[...]            # (tm, 1)
        valid = tgt != pad_id
        nll = jnp.where(valid, lse - t_ref[...], 0.0)     # select -> NaN-safe
        out_ref[...] = jnp.sum(nll).reshape(1, 1)


def _choose_tiles(rows, vocab, itemsize, tile_budget):
    """Pick (tm, tv). tv <= 2048 lanes (multiple of 128 or the full vocab);
    tm sized so 2 double-buffered input copies + ~4 f32 (tm, tv) temporaries
    fit the per-tile VMEM budget."""
    TV_MAX = 2048                                        # multiple of 128
    tv = vocab if vocab <= TV_MAX else TV_MAX
    per_row = max(1, tv * (2 * itemsize + 16))
    tm = tile_budget // per_row
    tm = max(8, min(1024, (tm // 8) * 8))
    rows_pad8 = max(8, ((rows + 7) // 8) * 8)
    return min(tm, rows_pad8), tv


def cross_entropy_loss(input_ids, logits, *, pad_id=0, tm=None, tv=None):
    """input_ids: (B, T) int ; logits: (B, T, V) float (f32 or bf16).

    Returns the scalar mean NLL over non-pad next-token targets (f32).
    """
    B, T, V = logits.shape
    rows = T - 1                          # positions that predict a next token
    itemsize = jnp.dtype(logits.dtype).itemsize

    # Generation-aware VMEM capacity (v7x: 64 MiB, v5e/v6e: 128 MiB).
    try:
        vmem_cap = int(pltpu.get_tpu_info().vmem_capacity_bytes)
    except Exception:  # pragma: no cover - conservative fallback
        vmem_cap = 64 << 20

    tile_budget = max(8 << 20, min(vmem_cap // 3, 24 << 20))
    auto_tm, auto_tv = _choose_tiles(rows, V, itemsize, tile_budget)
    tm = auto_tm if tm is None else tm
    tv = auto_tv if tv is None else tv

    n_tiles = max(1, (rows + tm - 1) // tm)
    nv = max(1, (V + tv - 1) // tv)
    Tp = n_tiles * tm

    # Shift targets by +1 and pad the tail with pad_id (tiny int32 tensor).
    targets = input_ids[:, 1:].astype(jnp.int32)                     # (B, rows)
    targets = jnp.pad(targets, ((0, 0), (0, Tp - rows)),
                      constant_values=pad_id)                        # (B, Tp)
    targets3d = targets.reshape(B, Tp, 1)

    # Valid-token count done once in the wrapper (cheap, int32 only).
    count = jnp.sum((input_ids[:, 1:] != pad_id).astype(jnp.float32))

    # Scoped VMEM: double-buffered logits chunks + ~4 live (tm, tv) f32
    # temporaries + targets/scratch, plus headroom; capped at physical VMEM.
    tile_elems = tm * tv
    needed = (2 * tile_elems * itemsize       # double-buffered input blocks
              + 4 * tile_elems * 4            # in-kernel (tm, tv) temporaries
              + 8 * tm * 4                    # targets buffers + (tm,1) scratch
              + (1 << 20))                    # misc slack
    vmem_limit = int(min(vmem_cap, max(needed + (16 << 20), 32 << 20)))

    kernel = functools.partial(_ce_kernel, pad_id=pad_id, vocab=V, tv=tv)

    partial = pl.pallas_call(
        kernel,
        out_shape=jax.ShapeDtypeStruct((B, n_tiles, 1, 1), jnp.float32),
        grid_spec=pltpu.PrefetchScalarGridSpec(
            num_scalar_prefetch=0,
            grid=(B, n_tiles, nv),
            in_specs=[
                # shifted targets (B, Tp, 1): squeeze batch, tile token axis
                pl.BlockSpec((None, tm, 1), lambda b, i, v: (b, i, 0)),
                # logits consumed directly from (B, T, V): vocab-chunked blocks
                pl.BlockSpec((None, tm, tv), lambda b, i, v: (b, i, v)),
            ],
            out_specs=pl.BlockSpec((None, None, 1, 1),
                                   lambda b, i, v: (b, i, 0, 0)),
            scratch_shapes=[
                pltpu.VMEM((tm, 1), jnp.float32),   # running max
                pltpu.VMEM((tm, 1), jnp.float32),   # running sum-exp
                pltpu.VMEM((tm, 1), jnp.float32),   # running target logit
            ],
        ),
        compiler_params=pltpu.CompilerParams(
            dimension_semantics=("parallel", "parallel", "arbitrary"),
            vmem_limit_bytes=vmem_limit,
        ),
    )(targets3d, logits)

    return jnp.sum(partial) / count


def _reference(input_ids, logits, pad_id=0):
    # Pure-JAX reference matching F.cross_entropy(..., ignore_index=pad_id).
    tgt = input_ids[:, 1:].reshape(-1)
    lg = logits[:, :-1, :].reshape(-1, logits.shape[-1]).astype(jnp.float32)
    logp = jax.nn.log_softmax(lg, axis=-1)
    nll = -jnp.take_along_axis(logp, tgt[:, None], axis=-1)[:, 0]
    valid = (tgt != pad_id).astype(jnp.float32)
    return jnp.sum(nll * valid) / jnp.sum(valid)


if __name__ == "__main__":
    pad_id = 0
    key = jax.random.PRNGKey(0)

    # --- Test 1: small f32, auto tiling (single token tile, single vocab chunk)
    B, T, V = 2, 8, 32
    k_ids, k_logits, key = jax.random.split(key, 3)
    input_ids = jax.random.randint(k_ids, (B, T), 0, V, dtype=jnp.int32)
    input_ids = input_ids.at[0, 3].set(pad_id).at[1, 6].set(pad_id)
    logits = jax.random.normal(k_logits, (B, T, V), dtype=jnp.float32)

    loss = jax.block_until_ready(cross_entropy_loss(input_ids, logits, pad_id=pad_id))
    ref = _reference(input_ids, logits, pad_id=pad_id)
    assert jnp.allclose(loss, ref, atol=1e-5, rtol=1e-5), (loss, ref)

    # --- Test 2: bf16, ragged token tail, multi token-tile, multi vocab-chunk
    B2, T2, V2 = 2, 21, 160
    k_ids2, k_logits2, key = jax.random.split(key, 3)
    input_ids2 = jax.random.randint(k_ids2, (B2, T2), 0, V2, dtype=jnp.int32)
    input_ids2 = input_ids2.at[0, 5].set(pad_id).at[1, 12].set(pad_id)
    logits2 = jax.random.normal(k_logits2, (B2, T2, V2), dtype=jnp.bfloat16)

    loss2 = jax.block_until_ready(
        cross_entropy_loss(input_ids2, logits2, pad_id=pad_id, tm=8, tv=128))
    ref2 = _reference(input_ids2, logits2, pad_id=pad_id)
    assert jnp.allclose(loss2, ref2, atol=1e-4, rtol=1e-4), (loss2, ref2)

    print("KERNEL_OK")
</pallas_src>

<mosaic_0001>
module attributes {stable_mosaic.version = 11 : i64} {
  func.func @_ce_kernel(%arg0: i32, %arg1: i32, %arg2: i32, %arg3: memref<1x8x1xi32, #tpu.memory_space<vmem>>, %arg4: memref<1x8x32xf32, #tpu.memory_space<vmem>>, %arg5: memref<1x1x1x1xf32, #tpu.memory_space<vmem>>, %arg6: memref<8x1xf32, #tpu.memory_space<vmem>>, %arg7: memref<8x1xf32, #tpu.memory_space<vmem>>, %arg8: memref<8x1xf32, #tpu.memory_space<vmem>>) attributes {dimension_semantics = [#tpu.dimension_semantics<parallel>, #tpu.dimension_semantics<parallel>, #tpu.dimension_semantics<arbitrary>], iteration_bounds = array<i64: 2, 1, 1>, scalar_prefetch = 0 : i64, scratch_operands = 3 : i64, tpu.core_type = #tpu.core_type<tc>, window_params = [{transform_indices = @transform_0, window_bounds = array<i64: 1, 8, 1>}, {transform_indices = @transform_1, window_bounds = array<i64: 1, 8, 32>}, {transform_indices = @transform_2, window_bounds = array<i64: 1, 1, 1, 1>}]} {
    %c0_i32 = arith.constant 0 : i32
    %0 = arith.cmpi eq, %arg2, %c0_i32 : i32
    %1 = arith.extui %0 : i1 to i32
    %c0_i32_0 = arith.constant 0 : i32
    %2 = arith.cmpi ne, %1, %c0_i32_0 : i32
    scf.if %2 {
      %cst_28 = arith.constant 0xFF800000 : f32
      %57 = vector.broadcast %cst_28 : f32 to vector<8x1xf32>
      %c0_29 = arith.constant 0 : index
      %c0_30 = arith.constant 0 : index
      %58 = vector.load %arg6[%c0_29, %c0_30] : memref<8x1xf32, #tpu.memory_space<vmem>>, vector<8x1xf32>
      tpu.vector_store %arg6[%c0_29, %c0_30], %57 {strides = array<i32>} : memref<8x1xf32, #tpu.memory_space<vmem>>, vector<8x1xf32>,
      %cst_31 = arith.constant 0.000000e+00 : f32
      %59 = vector.broadcast %cst_31 : f32 to vector<8x1xf32>
      %c0_32 = arith.constant 0 : index
      %c0_33 = arith.constant 0 : index
      %60 = vector.load %arg7[%c0_32, %c0_33] : memref<8x1xf32, #tpu.memory_space<vmem>>, vector<8x1xf32>
      tpu.vector_store %arg7[%c0_32, %c0_33], %59 {strides = array<i32>} : memref<8x1xf32, #tpu.memory_space<vmem>>, vector<8x1xf32>,
      %cst_34 = arith.constant 0.000000e+00 : f32
      %61 = vector.broadcast %cst_34 : f32 to vector<8x1xf32>
      %c0_35 = arith.constant 0 : index
      %c0_36 = arith.constant 0 : index
      %62 = vector.load %arg8[%c0_35, %c0_36] : memref<8x1xf32, #tpu.memory_space<vmem>>, vector<8x1xf32>
      tpu.vector_store %arg8[%c0_35, %c0_36], %61 {strides = array<i32>} : memref<8x1xf32, #tpu.memory_space<vmem>>, vector<8x1xf32>,
    } else {
    }
    %c0 = arith.constant 0 : index
    %c0_1 = arith.constant 0 : index
    %c0_2 = arith.constant 0 : index
    %3 = vector.load %arg3[%c0, %c0_1, %c0_2] : memref<1x8x1xi32, #tpu.memory_space<vmem>>, vector<1x8x1xi32>
    %4 = vector.shape_cast %3 : vector<1x8x1xi32> to vector<8x1xi32>
    %c0_3 = arith.constant 0 : index
    %c0_4 = arith.constant 0 : index
    %c0_5 = arith.constant 0 : index
    %5 = vector.load %arg4[%c0_3, %c0_4, %c0_5] : memref<1x8x32xf32, #tpu.memory_space<vmem>>, vector<1x8x32xf32>
    %6 = vector.shape_cast %5 : vector<1x8x32xf32> to vector<8x32xf32>
    %7 = tpu.iota {dimensions = array<i32: 1>} : vector<1x32xi32>
    %c32_i32 = arith.constant 32 : i32
    %8 = arith.muli %arg2, %c32_i32 : i32
    %9 = vector.broadcast %8 : i32 to vector<1x32xi32>
    %10 = arith.addi %7, %9 : vector<1x32xi32>
    %c32_i32_6 = arith.constant 32 : i32
    %11 = vector.broadcast %c32_i32_6 : i32 to vector<1x32xi32>
    %12 = arith.cmpi slt, %10, %11 : vector<1x32xi32>
    %cst = arith.constant 0xFF800000 : f32
    %13 = vector.shape_cast %12 : vector<1x32xi1> to vector<1x32xi1>
    %14 = vector.broadcast %13 : vector<1x32xi1> to vector<8x32xi1>
    %15 = vector.broadcast %cst : f32 to vector<8x32xf32>
    %16 = arith.select %14, %6, %15 : vector<8x32xi1>, vector<8x32xf32>
    %c0_7 = arith.constant 0 : index
    %c0_8 = arith.constant 0 : index
    %17 = vector.load %arg6[%c0_7, %c0_8] : memref<8x1xf32, #tpu.memory_space<vmem>>, vector<8x1xf32>
    %cst_9 = arith.constant dense<0xFF800000> : vector<8xf32>
    %18 = vector.multi_reduction <maximumf>, %16, %cst_9 [1] : vector<8x32xf32> to vector<8xf32>
    %19 = vector.shape_cast %18 : vector<8xf32> to vector<8x1xf32>
    %20 = arith.maximumf %17, %19 : vector<8x1xf32>
    %21 = vector.broadcast %20 : vector<8x1xf32> to vector<8x32xf32>
    %22 = arith.subf %16, %21 : vector<8x32xf32>
    %23 = math.exp %22 : vector<8x32xf32>
    %c0_10 = arith.constant 0 : index
    %c0_11 = arith.constant 0 : index
    %24 = vector.load %arg7[%c0_10, %c0_11] : memref<8x1xf32, #tpu.memory_space<vmem>>, vector<8x1xf32>
    %25 = arith.subf %17, %20 : vector<8x1xf32>
    %26 = math.exp %25 : vector<8x1xf32>
    %27 = arith.mulf %24, %26 : vector<8x1xf32>
    %cst_12 = arith.constant dense<0.000000e+00> : vector<8xf32>
    %28 = vector.multi_reduction <add>, %23, %cst_12 [1] : vector<8x32xf32> to vector<8xf32>
    %29 = vector.shape_cast %28 : vector<8xf32> to vector<8x1xf32>
    %30 = arith.addf %27, %29 : vector<8x1xf32>
    %c0_13 = arith.constant 0 : index
    %c0_14 = arith.constant 0 : index
    %31 = vector.load %arg7[%c0_13, %c0_14] : memref<8x1xf32, #tpu.memory_space<vmem>>, vector<8x1xf32>
    tpu.vector_store %arg7[%c0_13, %c0_14], %30 {strides = array<i32>} : memref<8x1xf32, #tpu.memory_space<vmem>>, vector<8x1xf32>,
    %c0_15 = arith.constant 0 : index
    %c0_16 = arith.constant 0 : index
    %32 = vector.load %arg6[%c0_15, %c0_16] : memref<8x1xf32, #tpu.memory_space<vmem>>, vector<8x1xf32>
    tpu.vector_store %arg6[%c0_15, %c0_16], %20 {strides = array<i32>} : memref<8x1xf32, #tpu.memory_space<vmem>>, vector<8x1xf32>,
    %33 = vector.broadcast %10 : vector<1x32xi32> to vector<8x32xi32>
    %34 = vector.broadcast %4 : vector<8x1xi32> to vector<8x32xi32>
    %35 = arith.cmpi eq, %33, %34 : vector<8x32xi32>
    %cst_17 = arith.constant 0.000000e+00 : f32
    %36 = vector.broadcast %cst_17 : f32 to vector<8x32xf32>
    %37 = arith.select %35, %22, %36 : vector<8x32xi1>, vector<8x32xf32>
    %cst_18 = arith.constant dense<0.000000e+00> : vector<8xf32>
    %38 = vector.multi_reduction <add>, %37, %cst_18 [1] : vector<8x32xf32> to vector<8xf32>
    %39 = vector.shape_cast %38 : vector<8xf32> to vector<8x1xf32>
    %c32_i32_19 = arith.constant 32 : i32
    %40 = arith.muli %arg2, %c32_i32_19 : i32
    %41 = vector.broadcast %40 : i32 to vector<8x1xi32>
    %42 = arith.cmpi sge, %4, %41 : vector<8x1xi32>
    %c1_i32 = arith.constant 1 : i32
    %43 = arith.addi %arg2, %c1_i32 : i32
    %c32_i32_20 = arith.constant 32 : i32
    %44 = arith.muli %43, %c32_i32_20 : i32
    %45 = vector.broadcast %44 : i32 to vector<8x1xi32>
    %46 = arith.cmpi slt, %4, %45 : vector<8x1xi32>
    %47 = arith.andi %42, %46 : vector<8x1xi1>
    %c0_21 = arith.constant 0 : index
    %c0_22 = arith.constant 0 : index
    %48 = vector.load %arg8[%c0_21, %c0_22] : memref<8x1xf32, #tpu.memory_space<vmem>>, vector<8x1xf32>
    %cst_23 = arith.constant 0.000000e+00 : f32
    %49 = vector.broadcast %cst_23 : f32 to vector<8x1xf32>
    %50 = arith.select %47, %20, %49 : vector<8x1xi1>, vector<8x1xf32>
    %51 = arith.addf %39, %50 : vector<8x1xf32>
    %52 = arith.addf %48, %51 : vector<8x1xf32>
    %c0_24 = arith.constant 0 : index
    %c0_25 = arith.constant 0 : index
    %53 = vector.load %arg8[%c0_24, %c0_25] : memref<8x1xf32, #tpu.memory_space<vmem>>, vector<8x1xf32>
    tpu.vector_store %arg8[%c0_24, %c0_25], %52 {strides = array<i32>} : memref<8x1xf32, #tpu.memory_space<vmem>>, vector<8x1xf32>,
    %c0_i32_26 = arith.constant 0 : i32
    %54 = arith.cmpi eq, %arg2, %c0_i32_26 : i32
    %55 = arith.extui %54 : i1 to i32
    %c0_i32_27 = arith.constant 0 : i32
    %56 = arith.cmpi ne, %55, %c0_i32_27 : i32
    scf.if %56 {
      %c0_28 = arith.constant 0 : index
      %c0_29 = arith.constant 0 : index
      %57 = vector.load %arg7[%c0_28, %c0_29] : memref<8x1xf32, #tpu.memory_space<vmem>>, vector<8x1xf32>
      %58 = math.log %57 : vector<8x1xf32>
      %c0_30 = arith.constant 0 : index
      %c0_31 = arith.constant 0 : index
      %59 = vector.load %arg6[%c0_30, %c0_31] : memref<8x1xf32, #tpu.memory_space<vmem>>, vector<8x1xf32>
      %60 = arith.addf %58, %59 : vector<8x1xf32>
      %c0_i32_32 = arith.constant 0 : i32
      %61 = vector.broadcast %c0_i32_32 : i32 to vector<8x1xi32>
      %62 = arith.cmpi ne, %4, %61 : vector<8x1xi32>
      %c0_33 = arith.constant 0 : index
      %c0_34 = arith.constant 0 : index
      %63 = vector.load %arg8[%c0_33, %c0_34] : memref<8x1xf32, #tpu.memory_space<vmem>>, vector<8x1xf32>
      %64 = arith.subf %60, %63 : vector<8x1xf32>
      %cst_35 = arith.constant 0.000000e+00 : f32
      %65 = vector.broadcast %cst_35 : f32 to vector<8x1xf32>
      %66 = arith.select %62, %64, %65 : vector<8x1xi1>, vector<8x1xf32>
      %67 = vector.shape_cast %66 : vector<8x1xf32> to vector<1x8x1xf32>
      %cst_36 = arith.constant dense<0.000000e+00> : vector<1xf32>
      %68 = vector.multi_reduction <add>, %67, %cst_36 [1, 2] : vector<1x8x1xf32> to vector<1xf32>
      %69 = vector.shape_cast %68 : vector<1xf32> to vector<1x1x1xf32>
      %70 = vector.extract %69[0, 0, 0] : f32 from vector<1x1x1xf32>
      %71 = vector.broadcast %70 : f32 to vector<1x1xf32>
      %c0_37 = arith.constant 0 : index
      %c0_38 = arith.constant 0 : index
      %c0_39 = arith.constant 0 : index
      %c0_40 = arith.constant 0 : index
      %72 = vector.load %arg5[%c0_37, %c0_38, %c0_39, %c0_40] : memref<1x1x1x1xf32, #tpu.memory_space<vmem>>, vector<1x1x1x1xf32>
      %73 = vector.shape_cast %72 : vector<1x1x1x1xf32> to vector<1x1xf32>
      %74 = vector.shape_cast %71 : vector<1x1xf32> to vector<1x1x1x1xf32>
      tpu.vector_store %arg5[%c0_37, %c0_38, %c0_39, %c0_40], %74 {strides = array<i32>} : memref<1x1x1x1xf32, #tpu.memory_space<vmem>>, vector<1x1x1x1xf32>,
    } else {
    }
    return
  }
  func.func @transform_0(%arg0: i32, %arg1: i32, %arg2: i32) -> (i32, i32, i32) {
    %c0_i32 = arith.constant 0 : i32
    %c0_i32_0 = arith.constant 0 : i32
    return %arg0, %arg1, %c0_i32 : i32, i32, i32
  }
  func.func @transform_1(%arg0: i32, %arg1: i32, %arg2: i32) -> (i32, i32, i32) {
    %c0_i32 = arith.constant 0 : i32
    return %arg0, %arg1, %arg2 : i32, i32, i32
  }
  func.func @transform_2(%arg0: i32, %arg1: i32, %arg2: i32) -> (i32, i32, i32, i32) {
    %c0_i32 = arith.constant 0 : i32
    %c0_i32_0 = arith.constant 0 : i32
    %c0_i32_1 = arith.constant 0 : i32
    return %arg0, %arg1, %c0_i32, %c0_i32_0 : i32, i32, i32, i32
  }
}

</mosaic_0001>

<llo_original>
// kernel: tpu_custom_call.1
$region0: #{tpu_custom_call.1}
  #allocation0 [shape = 'u32[]', space=smem, size = 0x4, offset = 0x4, fixed_abs, tag = 'smem constant byte address 0x4 - core index']
  #allocation1 [shape = 'u32[144,128]{1,0:T(1,128)}', space=vmem, size = 0x12000, scoped, tag = 'internal scratch']
  #allocation2 [shape = 'f32[8,1]{1,0:T(8,128)}', space=vmem, size = 0x1000, scoped, tag = 'scratch operand']
  #allocation3 [shape = 'f32[8,1]{1,0:T(8,128)}', space=vmem, size = 0x1000, scoped, tag = 'scratch operand']
  #allocation4 [shape = 'f32[8,1]{1,0:T(8,128)}', space=vmem, size = 0x1000, scoped, tag = 'scratch operand']
  %s0 = inlined_call_operand.vmem [shape: s32[2,8,1], index: 0, kind: input, shape index: {}]
  %s1 = inlined_call_operand.vmem [shape: f32[2,8,32], index: 1, kind: input, shape index: {}]
  %s2 = inlined_call_operand.vmem [shape: f32[2,1,1,1], index: 2, kind: output, shape index: {}]
  %s3 = sld [smem:[#allocation0]]
  $region49: #{tpu_custom_call.1} parent=0
    _
  %s5 = ssub.s32 1, %s3
  %s6 = scalar_select 0, %s5, %s3
  loop: start=0, step=1, limit=4
  $region2: #{tpu_custom_call.1} parent=0 // loop_pre_header
    _
  $region3: #{tpu_custom_call.1} parent=0 // loop_header
    %s8 = sphi 0, %s12
    %p9 = scmp.ge.s32.totalorder %s8, 4
    %s15 = sphi 0, %s34
    %s16 = sphi 0, %s30
    %s17 = sphi 0, %s26
    %s18 = sphi 0, %s15
    %s19 = sphi 0, %s16
    %s20 = sphi 0, %s17
    %s21 = sphi 0, %s18
    %s22 = sphi 0, %s19
    %s23 = sphi 0, %s20
    %s39 = sphi 0, %s41
    %s42 = sphi 0, %s39
    %s43 = sphi 0, %s42
    %s59 = sphi 0, %s43
    %s69 = sphi 0, %s71
    %s72 = sphi 0, %s69
    %s73 = sphi 0, %s72
    %s89 = sphi 0, %s73
    %s97 = sphi 0, %s99
    %s100 = sphi 0, %s97
    %s101 = sphi 0, %s100
    %s117 = sphi 0, %s101
  $region4: #{tpu_custom_call.1} parent=0 // loop_header_branch
    %11 = sbr.rel (%p9) target = $region8
  $region5: #{tpu_custom_call.1} parent=0 // loop_body
    %s13 = ssub.s32 %s8, 1
    %s14 = ssub.s32 %s8, 2
    %s24 = sadd.s32 1, %s17
    %p25 = scmp.ge.s32.totalorder %s24, 1
    %s26 = scalar_select %p25, 0, %s24
    %s27 = sadd.s32 1, %s16
    %s28 = scalar_select %p25, %s27, %s16
    %p29 = scmp.ge.s32.totalorder %s28, 1
    %s30 = scalar_select %p29, 0, %s28
    %s31 = sadd.s32 1, %s15
    %s32 = scalar_select %p29, %s31, %s15
    %p33 = scmp.ge.s32.totalorder %s32, 2
    %s34 = scalar_select %p33, 0, %s32
    %s35 = ssub.s32 %s15, %s34
    %s36 = ssub.s32 %s16, %s30
    %s37 = sor.u32 %s35, %s36
    %p38 = scmp.eq.s32.totalorder %s37, 0
    %s40 = sadd.s32 %s39, 1
    %s41 = scalar_select %p38, %s39, %s40
    %p44 = pneg %p38
    %p45 = scmp.eq.s32.totalorder %s8, 1
    %p46 = por %p44, %p45
    %p47 = scmp.ne.s32.totalorder %s39, %s42
    %p48 = scmp.eq.s32.totalorder %s8, 0
    %p49 = por %p47, %p48
    %p50 = scmp.ne.s32.totalorder %s39, %s42
    %p51 = scmp.eq.s32.totalorder %s13, 1
    %p52 = por %p50, %p51
    %p53 = scmp.ne.s32.totalorder %s42, %s43
    %p54 = scmp.eq.s32.totalorder %s13, 0
    %p55 = por %p53, %p54
    %p56 = scmp.ne.s32.totalorder %s42, %s43
    %p57 = scmp.eq.s32.totalorder %s14, 1
    %p58 = por %p56, %p57
    %p60 = scmp.ne.s32.totalorder %s43, %s59
    %p61 = scmp.eq.s32.totalorder %s14, 0
    %p62 = por %p60, %p61
    %s63 = ssub.s32 %s15, %s34
    %s64 = ssub.s32 %s16, %s30
    %s65 = sor.u32 %s63, %s64
    %s66 = ssub.s32 %s17, %s26
    %s67 = sor.u32 %s65, %s66
    %p68 = scmp.eq.s32.totalorder %s67, 0
    %s70 = sadd.s32 %s69, 1
    %s71 = scalar_select %p68, %s69, %s70
    %p74 = pneg %p68
    %p75 = scmp.eq.s32.totalorder %s8, 1
    %p76 = por %p74, %p75
    %p77 = scmp.ne.s32.totalorder %s69, %s72
    %p78 = scmp.eq.s32.totalorder %s8, 0
    %p79 = por %p77, %p78
    %p80 = scmp.ne.s32.totalorder %s69, %s72
    %p81 = scmp.eq.s32.totalorder %s13, 1
    %p82 = por %p80, %p81
    %p83 = scmp.ne.s32.totalorder %s72, %s73
    %p84 = scmp.eq.s32.totalorder %s13, 0
    %p85 = por %p83, %p84
    %p86 = scmp.ne.s32.totalorder %s72, %s73
    %p87 = scmp.eq.s32.totalorder %s14, 1
    %p88 = por %p86, %p87
    %p90 = scmp.ne.s32.totalorder %s73, %s89
    %p91 = scmp.eq.s32.totalorder %s14, 0
    %p92 = por %p90, %p91
    %s93 = ssub.s32 %s15, %s34
    %s94 = ssub.s32 %s16, %s30
    %s95 = sor.u32 %s93, %s94
    %p96 = scmp.eq.s32.totalorder %s95, 0
    %s98 = sadd.s32 %s97, 1
    %s99 = scalar_select %p96, %s97, %s98
    %p102 = pneg %p96
    %p103 = scmp.eq.s32.totalorder %s8, 1
    %p104 = por %p102, %p103
    %p105 = scmp.ne.s32.totalorder %s97, %s100
    %p106 = scmp.eq.s32.totalorder %s8, 0
    %p107 = por %p105, %p106
    %p108 = scmp.ne.s32.totalorder %s97, %s100
    %p109 = scmp.eq.s32.totalorder %s13, 1
    %p110 = por %p108, %p109
    %p111 = scmp.ne.s32.totalorder %s100, %s101
    %p112 = scmp.eq.s32.totalorder %s13, 0
    %p113 = por %p111, %p112
    %p114 = scmp.ne.s32.totalorder %s100, %s101
    %p115 = scmp.eq.s32.totalorder %s14, 1
    %p116 = por %p114, %p115
    %p118 = scmp.ne.s32.totalorder %s101, %s117
    %p119 = scmp.eq.s32.totalorder %s14, 0
    %p120 = por %p118, %p119
    %p121 = scmp.le.s32.totalorder 1, %s8
    %p122 = scmp.lt.s32.totalorder %s8, 3
    %p123 = pnand %p121, %p122
    %p124 = pneg %p123
    // Predicated region
    $region9: #{tpu_custom_call.1} parent=5 // pred_check
      _
    $region10: #{tpu_custom_call.1} parent=5 // pred_check_branch
      %126 = sbr.rel (%p123) target = $region12
    $region11: #{tpu_custom_call.1} parent=5 // pred_region
      %s127 = ssub.s32 %s8, 1
    $region12: #{tpu_custom_call.1} parent=5 // pred_fallthru
      _
    %p128 = scmp.lt.s32.totalorder %s8, 2
    // Predicated region
    $region13: #{tpu_custom_call.1} parent=5 // pred_check
      %p129 = pneg %p128
    $region14: #{tpu_custom_call.1} parent=5 // pred_check_branch
      %131 = sbr.rel (%p129) target = $region16
    $region15: #{tpu_custom_call.1} parent=5 // pred_region
      // Predicated region
      $region17: #{tpu_custom_call.1} parent=15 // pred_check
        %p132 = pneg %p49
      $region18: #{tpu_custom_call.1} parent=15 // pred_check_branch
        %134 = sbr.rel (%p132) target = $region20
      $region19: #{tpu_custom_call.1} parent=15 // pred_region
        %p135 = scmp.lt.s32.totalorder %s15, 1
        %s136 = scalar_select %p135, %s15, 1
        %p137 = scmp.lt.s32.totalorder %s16, 0
        %s138 = scalar_select %p137, %s16, 0
        %s139 = sadd.s32 %s138, %s136
        %s140 = smul.addr %s139, 8
        %s141 = scalar_lea.vmem %s0, %s140
      $region20: #{tpu_custom_call.1} parent=15 // pred_fallthru
        _
      // Predicated region
      $region21: #{tpu_custom_call.1} parent=15 // pred_check
        %p142 = pneg %p79
      $region22: #{tpu_custom_call.1} parent=15 // pred_check_branch
        %144 = sbr.rel (%p142) target = $region24
      $region23: #{tpu_custom_call.1} parent=15 // pred_region
        %p145 = scmp.lt.s32.totalorder %s15, 1
        %s146 = scalar_select %p145, %s15, 1
        %p147 = scmp.lt.s32.totalorder %s16, 0
        %s148 = scalar_select %p147, %s16, 0
        %p149 = scmp.lt.s32.totalorder %s17, 0
        %s150 = scalar_select %p149, %s17, 0
        %s151 = sadd.s32 %s150, %s148
        %s152 = sadd.s32 %s151, %s146
        %s153 = smul.addr %s152, 8
        %s154 = scalar_lea.vmem %s1, %s153
      $region24: #{tpu_custom_call.1} parent=15 // pred_fallthru
        _
    $region16: #{tpu_custom_call.1} parent=5 // pred_fallthru
      _
    %p155 = scmp.le.s32.totalorder 1, %s8
    %p156 = scmp.lt.s32.totalorder %s8, 3
    %p157 = pnand %p155, %p156
    %p158 = pneg %p157
    // Predicated region
    $region25: #{tpu_custom_call.1} parent=5 // pred_check
      _
    $region26: #{tpu_custom_call.1} parent=5 // pred_check_branch
      %160 = sbr.rel (%p157) target = $region28
    $region27: #{tpu_custom_call.1} parent=5 // pred_region
      %s161 = ssub.s32 %s8, 1
      %p162 = scmp.lt.s32.totalorder %s18, 1
      %s163 = scalar_select %p162, %s18, 1
      %p164 = scmp.lt.s32.totalorder %s19, 0
      %s165 = scalar_select %p164, %s19, 0
      %s166 = sadd.s32 %s165, %s163
      %s167 = smul.addr %s166, 8
      %s168 = scalar_lea.vmem %s0, %s167
      %p169 = pneg %p55
      %p170 = pneg %p52
      %p171 = scmp.lt.s32.totalorder %s18, 1
      %s172 = scalar_select %p171, %s18, 1
      %p173 = scmp.lt.s32.totalorder %s19, 0
      %s174 = scalar_select %p173, %s19, 0
      %p175 = scmp.lt.s32.totalorder %s20, 0
      %s176 = scalar_select %p175, %s20, 0
      %s177 = sadd.s32 %s176, %s174
      %s178 = sadd.s32 %s177, %s172
      %s179 = smul.addr %s178, 8
      %s180 = scalar_lea.vmem %s1, %s179
      %p181 = pneg %p85
      %p182 = pneg %p82
      %p183 = pneg %p113
      %p184 = pneg %p110
      %p185 = scmp.lt.s32.totalorder %s18, 1
      %s186 = scalar_select %p185, %s18, 1
      %p187 = scmp.lt.s32.totalorder %s19, 0
      %s188 = scalar_select %p187, %s19, 0
      %s189 = sadd.s32 %s188, %s186
      %s190 = scalar_lea.vmem %s2, %s189
      %p191 = scmp.lt.s32.totalorder %s18, 1
      %s192 = scalar_select %p191, %s18, 1
      %p193 = scmp.lt.s32.totalorder %s19, 0
      %s194 = scalar_select %p193, %s19, 0
      %s195 = sadd.s32 %s194, %s192
      %s196 = smul.addr %s195, 8
      %s197 = scalar_lea.vmem %s0, %s196
      %p198 = scmp.lt.s32.totalorder %s18, 1
      %s199 = scalar_select %p198, %s18, 1
      %p200 = scmp.lt.s32.totalorder %s19, 0
      %s201 = scalar_select %p200, %s19, 0
      %p202 = scmp.lt.s32.totalorder %s20, 0
      %s203 = scalar_select %p202, %s20, 0
      %s204 = sadd.s32 %s203, %s201
      %s205 = sadd.s32 %s204, %s199
      %s206 = smul.addr %s205, 8
      %s207 = scalar_lea.vmem %s1, %s206
      %p208 = scmp.lt.s32.totalorder %s18, 1
      %s209 = scalar_select %p208, %s18, 1
      %p210 = scmp.lt.s32.totalorder %s19, 0
      %s211 = scalar_select %p210, %s19, 0
      %s212 = sadd.s32 %s211, %s209
      %s213 = scalar_lea.vmem %s2, %s212
      %p214 = scmp.eq.s32.totalorder %s20, 0
      // Predicated region
      $region29: #{tpu_custom_call.1} parent=27 // pred_check
        %p215 = pneg %p214
      $region30: #{tpu_custom_call.1} parent=27 // pred_check_branch
        %217 = sbr.rel (%p215) target = $region32
      $region31: #{tpu_custom_call.1} parent=27 // pred_region
        %vm218 = vcmask 7168
        %219 = vst.msk [vmem:[#allocation2] sm:$0xff] %vm218, -inf
        %220 = vst.msk [vmem:[#allocation3] sm:$0xff] %vm218, 0.0
        %221 = vst.msk [vmem:[#allocation4] sm:$0xff] %vm218, 0.0
      $region32: #{tpu_custom_call.1} parent=27 // pred_fallthru
        _
      %v222 = vld [vmem:[%s197] sm:$0xff]
      %v223 = vld [vmem:[%s207] sm:$0xff]
      %v224 = vlaneseq
      %v225 = vand.u32 %v224, 127
      %s226 = smul.u32 %s20, 32
      %v227 = vstv %s226
      %v228 = vadd.s32 %v225, %v227
      %vm229 = vcmp.lt.s32.totalorder %v228, 32
      %v230 = vsel %vm229, 1, 0
      %vm231 = vcmp.eq.s32.totalorder %v230, 1
      %v232 = vsel %vm231, %v223, -inf
      %v233 = vld [vmem:[#allocation2] sm:$0xff]
      %vm234 = vcmask 261120
      %v235 = vsel %vm234, %v232, -inf
      %236 = vmax.xlane.f32.xlu0 %v235
      %v237 = vpop.xlane.xlu0 %236
      %v238 = vmax.f32 %v233, %v237
      %240 = vset.pattern.permute.xlu0 0
      %241 = vperm.xlu0 %240, %v238
      %v242 = vpop.permute.xlu0 %241
      %v244 = vsub.f32 %v232, %v242
      %v245 = vmul.f32 %v244, 1.442695
      %v246 = vpow.pop %v245
      %v247 = vld [vmem:[#allocation3] sm:$0xff]
      %v248 = vsub.f32 %v233, %v238
      %v249 = vmul.f32 %v248, 1.442695
      %v250 = vpow.pop %v249
      %v251 = vmul.f32 %v247, %v250
      %v252 = vsel %vm234, %v246, 0.0
      %253 = vadd.xlane.f32.xlu0 %v252
      %v254 = vpop.xlane.xlu0 %253
      %v255 = vadd.f32 %v251, %v254
      %vm256 = vcmask 7168
      %257 = vst.msk [vmem:[#allocation3] sm:$0xff] %vm256, %v255
      %258 = vst.msk [vmem:[#allocation2] sm:$0xff] %vm256, %v238
      %259 = vset.pattern.permute.xlu0 0
      %260 = vperm.xlu0 %259, %v222
      %v261 = vpop.permute.xlu0 %260
      %vm262 = vcmp.eq.s32.totalorder %v228, %v261
      %v263 = vsel %vm262, %v244, 0.0
      %v264 = vsel %vm234, %v263, 0.0
      %265 = vadd.xlane.f32.xlu0 %v264
      %v266 = vpop.xlane.xlu0 %265
      %vm267 = vcmp.ge.s32.totalorder %v222, %v227
      %s268 = sadd.s32 %s20, 1
      %s269 = smul.u32 %s268, 32
      %v270 = vstv %s269
      %vm271 = vcmp.lt.s32.totalorder %v222, %v270
      %vm272 = vmand %vm267, %vm271
      %v273 = vld [vmem:[#allocation4] sm:$0xff]
      %v274 = vsel %vm272, %v238, 0.0
      %v275 = vadd.f32 %v266, %v274
      %v276 = vadd.f32 %v273, %v275
      %277 = vst.msk [vmem:[#allocation4] sm:$0xff] %vm256, %v276
      // Predicated region
      $region33: #{tpu_custom_call.1} parent=27 // pred_check
        %p278 = pneg %p214
      $region34: #{tpu_custom_call.1} parent=27 // pred_check_branch
        %280 = sbr.rel (%p278) target = $region36
      $region35: #{tpu_custom_call.1} parent=27 // pred_region
        %v281 = vld [vmem:[#allocation3] sm:$0xff]
        %v282 = vlog2.pop %v281
        %v283 = vmul.f32 %v282, 0.6931472
        %v284 = vld [vmem:[#allocation2] sm:$0xff]
        %v285 = vadd.f32 %v283, %v284
        %vm286 = vcmp.ne.s32.totalorder %v222, 0
        %v287 = vld [vmem:[#allocation4] sm:$0xff]
        %v288 = vsub.f32 %v285, %v287
        %v289 = vsel %vm286, %v288, 0.0
        %v290 = vsel %vm256, %v289, 0.0
        %291 = vadd.xlane.f32.xlu0 %v290
        %v292 = vpop.xlane.xlu0 %291
        %v293 = vrot.slane %v292, 4
        %v294 = vadd.f32 %v292, %v293
        %v295 = vrot.slane %v294, 2
        %v296 = vadd.f32 %v294, %v295
        %v297 = vrot.slane %v296, 1
        %v298 = vadd.f32 %v296, %v297
        %s299 = vtos %v298
        %v300 = vstv %s299
        %vm301 = vcmask 0
        %302 = vst.msk [vmem:[%s213] sm:$0x1] %vm301, %v300
      $region36: #{tpu_custom_call.1} parent=27 // pred_fallthru
        _
      %p303 = scmp.lt.s32.totalorder %s18, 1
      %s304 = scalar_select %p303, %s18, 1
      %p305 = scmp.lt.s32.totalorder %s19, 0
      %s306 = scalar_select %p305, %s19, 0
      %s307 = sadd.s32 %s306, %s304
      %s308 = scalar_lea.vmem %s2, %s307
      // Predicated region
      $region37: #{tpu_custom_call.1} parent=27 // pred_check
        %p309 = pneg %p110
      $region38: #{tpu_custom_call.1} parent=27 // pred_check_branch
        %311 = sbr.rel (%p309) target = $region40
      $region39: #{tpu_custom_call.1} parent=27 // pred_region
        _
      $region40: #{tpu_custom_call.1} parent=27 // pred_fallthru
        _
    $region28: #{tpu_custom_call.1} parent=5 // pred_fallthru
      _
    %p312 = scmp.le.s32.totalorder 2, %s8
    // Predicated region
    $region41: #{tpu_custom_call.1} parent=5 // pred_check
      %p313 = pneg %p312
    $region42: #{tpu_custom_call.1} parent=5 // pred_check_branch
      %315 = sbr.rel (%p313) target = $region44
    $region43: #{tpu_custom_call.1} parent=5 // pred_region
      %s316 = ssub.s32 %s8, 2
      // Predicated region
      $region45: #{tpu_custom_call.1} parent=43 // pred_check
        %p317 = pneg %p116
      $region46: #{tpu_custom_call.1} parent=43 // pred_check_branch
        %319 = sbr.rel (%p317) target = $region48
      $region47: #{tpu_custom_call.1} parent=43 // pred_region
        %p320 = scmp.lt.s32.totalorder %s21, 1
        %s321 = scalar_select %p320, %s21, 1
        %p322 = scmp.lt.s32.totalorder %s22, 0
        %s323 = scalar_select %p322, %s22, 0
        %s324 = sadd.s32 %s323, %s321
        %s325 = scalar_lea.vmem %s2, %s324
      $region48: #{tpu_custom_call.1} parent=43 // pred_fallthru
        _
    $region44: #{tpu_custom_call.1} parent=5 // pred_fallthru
      _
  $region6: #{tpu_custom_call.1} parent=0 // loop_footer
    %s12 = sadd.s32 1, %s8
  $region7: #{tpu_custom_call.1} parent=0 // loop_footer_branch
    %7 = sbr.rel target = $region3
  $region8: #{tpu_custom_call.1} parent=0 // loop_exit
    _

</llo_original>
